<compile_context>
chip_gen: v7x
topology: tpu7x:2x2x1
jax: 0.10.0
libtpu: 0.0.40
codegen_flags: <defaults>
</compile_context>

<pallas_src>
import functools

import jax
import jax.numpy as jnp
from jax import lax
from jax.experimental import pallas as pl
from jax.experimental.pallas import tpu as pltpu


# ----------------------------------------------------------------------------- kernels

def _disp_aug_matmul_kernel(coef_ref, d0_ref, src_ref, out_ref, w_ref, *, L):
    """One grid step = one (batch, channel-tile); out = S @ W, W cached per batch.

    coef_ref: (1, 2, L) VMEM f32  -- row 0: weight a[l] on S[l+d0], row 1: c[l] on S[l+d0+1]
    d0_ref:   (B,) SMEM int32     -- per-batch integer displacement floor(d)
    src_ref:  (1, TC, L) VMEM     -- source tile, NCL layout (L on lanes)
    out_ref:  (1, TC, L) VMEM
    w_ref:    (L, L) VMEM f32 scratch, persists across the ci grid axis
    """
    b = pl.program_id(0)

    # Build the two-diagonal resample matrix once per batch (ci == 0) and reuse it
    # for every remaining channel tile of that batch (ci axis is "arbitrary").
    @pl.when(pl.program_id(1) == 0)
    def _build_w():
        a = coef_ref[0, 0:1, :]                                   # (1, L)
        c = coef_ref[0, 1:2, :]                                   # (1, L)
        # W[k, l] = a[l]*[k == l + d0] + c[l]*[k == l + d0 + 1]; taps with
        # l + d0 (+1) outside [0, L-1] match no k -> zeros padding for free.
        diff = (lax.broadcasted_iota(jnp.int32, (L, L), 0)
                - lax.broadcasted_iota(jnp.int32, (L, L), 1))     # k - l
        t = diff - d0_ref[b]
        w_ref[...] = jnp.where(t == 0, a, jnp.where(t == 1, c, 0.0))

    # Gather + blend in one MXU matmul; lane-dense (TC, L) store.
    out_ref[0] = jnp.dot(
        src_ref[0].astype(jnp.float32), w_ref[...],
        preferred_element_type=jnp.float32,
    ).astype(out_ref.dtype)


def _disp_aug_roll_kernel(coef_ref, shift0_ref, shift1_ref, src_ref, out_ref, *, L):
    """Two-tap blend via dynamic lane rotation (no O(L^2) weight matrix).

    pltpu.roll follows jnp.roll semantics: roll(x, s, axis)[l] = x[(l - s) mod L],
    so shift0 = (-floor(d)) mod L gives r0[l] = S[(l + floor(d)) mod L]; wrapped
    positions are already weighted to zero in the coefficient rows.
    """
    b = pl.program_id(0)
    a = coef_ref[0, 0:1, :]                                       # (1, L)
    c = coef_ref[0, 1:2, :]                                       # (1, L)

    s = src_ref[0].astype(jnp.float32)                            # (TC, L)
    r0 = pltpu.roll(s, shift0_ref[b], axis=1)
    r1 = pltpu.roll(s, shift1_ref[b], axis=1)
    out_ref[0] = (a * r0 + c * r1).astype(out_ref.dtype)


# ----------------------------------------------------------------------------- host-side prep

def _host_coefficients(disps, L):
    """Per-batch lane-resident bilinear coefficient rows + integer shift scalars.

    out[b,c,l] = coef[b,0,l] * S[b,c,l+d0_b] + coef[b,1,l] * S[b,c,l+d0_b+1],
    with taps outside [0, L-1] already weighted to zero.
    """
    f32 = jnp.float32
    d = disps.astype(f32)[:, None]                                # (B, 1)
    l = jnp.arange(L, dtype=f32)[None, :]                         # (1, L)
    d0f = jnp.floor(d)
    wy = d - d0f                                                  # (B, 1)

    # Width axis of the internally duplicated (L, 2) image collapses to a scale fx.
    x = (l + d) / (L - 1.0)
    x0 = jnp.floor(x)
    wx = x - x0
    in_x0 = ((x0 >= 0.0) & (x0 <= 1.0)).astype(f32)
    in_x1 = ((x0 + 1.0 >= 0.0) & (x0 + 1.0 <= 1.0)).astype(f32)
    fx = (1.0 - wx) * in_x0 + wx * in_x1                          # (B, L)

    y0 = l + d0f
    v0 = ((y0 >= 0.0) & (y0 <= L - 1.0)).astype(f32)
    v1 = ((y0 + 1.0 >= 0.0) & (y0 + 1.0 <= L - 1.0)).astype(f32)

    a = fx * (1.0 - wy) * v0
    c = fx * wy * v1
    coef = jnp.stack([a, c], axis=1)                              # (B, 2, L)

    d0 = d0f[:, 0].astype(jnp.int32)                              # (B,)
    shift0 = (-d0) % L
    shift1 = (-(d0 + 1)) % L
    return coef, d0, shift0, shift1


def _vmem_budget_bytes():
    """~75% of physical VMEM (headroom for Mosaic internal scratch + double buffers)."""
    try:
        cap = getattr(pltpu.get_tpu_info(), "vmem_capacity_bytes", None)
        if cap:
            return int(cap) * 3 // 4
    except Exception:
        pass
    return 48 << 20  # safe even on v7x's 64 MiB; conservative on v5e/v6e's 128 MiB


def _choose_c_block(C, L, dtype, *, target_block_bytes, budget_bytes, w_bytes):
    """Pick a channel tile: dtype-aware sublane multiple, 128-row multiples when big,
    double-buffered in/out blocks + the W scratch kept inside the VMEM budget."""
    itemsize = jnp.dtype(dtype).itemsize
    m = max(8, 32 // itemsize)                 # 8 (f32) / 16 (bf16) / 32 (int8)
    if C <= m or C * L * itemsize <= target_block_bytes:
        return int(C)
    per_row = L * itemsize
    rows_target = target_block_bytes // per_row
    rows_budget = (budget_bytes - w_bytes) // (4 * per_row)   # 2x in + 2x out buffers
    tc = min(C, max(m, rows_target), max(m, rows_budget))
    if tc >= 128:
        tc = (tc // 128) * 128                 # full MXU rows for the S @ W path
    else:
        tc = max(m, (tc // m) * m)
    return int(min(C, tc))


# ----------------------------------------------------------------------------- wrapper

def disp_aug(source, mag, key, *, c_block=None, roll_min_length=512):
    """source: (B, C, L) float32 (NCL, like PyTorch); mag: python float.

    Returns (y_source (B, C, L), disps (B,)).
    """
    B, C, L = source.shape
    assert L >= 2, "need at least 2 positions for align_corners grid_sample"

    # disps = -2*mag*rand(B) + mag, exactly like the PyTorch module.
    u = jax.random.uniform(key, (B,), jnp.float32)
    disps = (mag - 2.0 * mag * u).astype(jnp.float32)

    coef, d0, shift0, shift1 = _host_coefficients(disps, L)

    budget = _vmem_budget_bytes()
    # Roll path: long lane-aligned L, or whenever the (L, L) W would eat the budget.
    use_roll = (L % 128 == 0) and (L >= roll_min_length or 4 * L * L > budget // 3)
    w_bytes = 0 if use_roll else 4 * L * L

    itemsize = jnp.dtype(source.dtype).itemsize
    if c_block is None:
        c_block = _choose_c_block(C, L, source.dtype,
                                  target_block_bytes=6 << 20,
                                  budget_bytes=budget, w_bytes=w_bytes)
    n_c = int(pl.cdiv(C, c_block))

    if use_roll:
        kernel = functools.partial(_disp_aug_roll_kernel, L=L)
        scalar_args = (shift0, shift1)
        scratch_shapes = []
        dims = ("parallel", "parallel")
    else:
        kernel = functools.partial(_disp_aug_matmul_kernel, L=L)
        scalar_args = (d0,)
        scratch_shapes = [pltpu.VMEM((L, L), jnp.float32)]       # per-batch cached W
        dims = ("parallel", "arbitrary")   # scratch carries state across the ci axis

    # VMEM budget: 2x src block + 2x out block (double buffering) + W + slack.
    block_bytes = c_block * L * itemsize
    vmem_est = 4 * block_bytes + w_bytes + (1 << 20)
    cp_kwargs = dict(dimension_semantics=dims)
    if vmem_est > (16 << 20):  # beyond v5e's default scoped-VMEM limit
        cp_kwargs["vmem_limit_bytes"] = int(min(budget, max(vmem_est * 3 // 2, 32 << 20)))

    smem_spec = pl.BlockSpec(memory_space=pltpu.MemorySpace.SMEM)
    in_specs = ([pl.BlockSpec((1, 2, L), lambda b, ci: (b, 0, 0))]      # coef rows
                + [smem_spec] * len(scalar_args)                        # per-batch scalars
                + [pl.BlockSpec((1, c_block, L), lambda b, ci: (b, ci, 0))])  # source

    out = pl.pallas_call(
        kernel,
        out_shape=jax.ShapeDtypeStruct((B, C, L), source.dtype),
        grid=(B, n_c),
        in_specs=in_specs,
        out_specs=pl.BlockSpec((1, c_block, L), lambda b, ci: (b, ci, 0)),
        scratch_shapes=scratch_shapes,
        compiler_params=pltpu.CompilerParams(**cp_kwargs),
    )(coef, *scalar_args, source)

    return out, disps


# ----------------------------------------------------------------------------- reference

def disp_aug_reference(source, disps):
    """Pure-JAX reference of the same grid_sample semantics (gather-based, for checking)."""
    B, C, L = source.shape
    l = jnp.arange(L, dtype=jnp.float32)[None, :]            # (1, L)
    d = disps[:, None]                                       # (B, 1)
    d0 = jnp.floor(d)
    wy = d - d0
    y0 = l + d0
    in_y0 = ((y0 >= 0) & (y0 <= L - 1)).astype(jnp.float32)
    in_y1 = ((y0 + 1 >= 0) & (y0 + 1 <= L - 1)).astype(jnp.float32)
    x = (l + d) / (L - 1.0)
    x0 = jnp.floor(x)
    wx = x - x0
    in_x0 = ((x0 >= 0) & (x0 <= 1)).astype(jnp.float32)
    in_x1 = ((x0 + 1 >= 0) & (x0 + 1 <= 1)).astype(jnp.float32)
    fx = (1 - wx) * in_x0 + wx * in_x1

    i0 = jnp.clip(y0.astype(jnp.int32), 0, L - 1)            # (B, L)
    i1 = jnp.clip(y0.astype(jnp.int32) + 1, 0, L - 1)
    g0 = jax.vmap(lambda s, i: s[:, i])(source, i0)          # (B, C, L)
    g1 = jax.vmap(lambda s, i: s[:, i])(source, i1)
    fx_ = fx[:, None, :]
    wy_ = wy[:, None, :]
    return fx_ * ((1 - wy_) * in_y0[:, None, :] * g0 + wy_ * in_y1[:, None, :] * g1)


# ----------------------------------------------------------------------------- test

if __name__ == "__main__":
    key = jax.random.PRNGKey(0)
    k_src, k_disp, k_src2, k_disp2 = jax.random.split(key, 4)

    # Test 1: small shape consistent with the module (single C tile).
    B, C, L = 2, 4, 16
    mag = 1.5
    source = jax.random.normal(k_src, (B, C, L), dtype=jnp.float32)
    y, disps = disp_aug(source, mag, k_disp)
    y = jax.block_until_ready(y)
    assert y.shape == (B, C, L) and y.dtype == jnp.float32
    y_ref = disp_aug_reference(source, disps)
    assert jnp.allclose(y, y_ref, atol=1e-4), "mismatch vs reference (small)"

    # Test 2: forced C-tiling -> exercises the per-batch W scratch reuse across ci.
    B2, C2, L2 = 2, 16, 128
    source2 = jax.random.normal(k_src2, (B2, C2, L2), dtype=jnp.float32)
    y2, disps2 = disp_aug(source2, 3.75, k_disp2, c_block=8)
    y2 = jax.block_until_ready(y2)
    y2_ref = disp_aug_reference(source2, disps2)
    assert jnp.allclose(y2, y2_ref, atol=1e-4), "mismatch vs reference (tiled C)"

    print("KERNEL_OK")
</pallas_src>

<mosaic_0001>
module attributes {stable_mosaic.version = 11 : i64} {
  func.func @_disp_aug_matmul_kernel(%arg0: i32, %arg1: i32, %arg2: memref<1x2x16xf32, #tpu.memory_space<vmem>>, %arg3: memref<2xi32, #tpu.memory_space<smem>>, %arg4: memref<1x4x16xf32, #tpu.memory_space<vmem>>, %arg5: memref<1x4x16xf32, #tpu.memory_space<vmem>>, %arg6: memref<16x16xf32, #tpu.memory_space<vmem>>) attributes {dimension_semantics = [#tpu.dimension_semantics<parallel>, #tpu.dimension_semantics<arbitrary>], iteration_bounds = array<i64: 2, 1>, scalar_prefetch = 0 : i64, scratch_operands = 1 : i64, tpu.core_type = #tpu.core_type<tc>, window_params = [{transform_indices = @transform_0, window_bounds = array<i64: 1, 2, 16>}, {transform_indices = @transform_1, window_bounds = array<i64: 2>}, {transform_indices = @transform_2, window_bounds = array<i64: 1, 4, 16>}, {transform_indices = @transform_3, window_bounds = array<i64: 1, 4, 16>}]} {
    %c0_i32 = arith.constant 0 : i32
    %0 = arith.cmpi eq, %arg1, %c0_i32 : i32
    %1 = arith.extui %0 : i1 to i32
    %c0_i32_0 = arith.constant 0 : i32
    %2 = arith.cmpi ne, %1, %c0_i32_0 : i32
    scf.if %2 {
      %c0_8 = arith.constant 0 : index
      %c0_9 = arith.constant 0 : index
      %c0_10 = arith.constant 0 : index
      %10 = vector.load %arg2[%c0_8, %c0_9, %c0_10] : memref<1x2x16xf32, #tpu.memory_space<vmem>>, vector<1x1x16xf32>
      %11 = vector.shape_cast %10 : vector<1x1x16xf32> to vector<1x16xf32>
      %c0_11 = arith.constant 0 : index
      %c1 = arith.constant 1 : index
      %c0_12 = arith.constant 0 : index
      %12 = vector.load %arg2[%c0_11, %c1, %c0_12] : memref<1x2x16xf32, #tpu.memory_space<vmem>>, vector<1x1x16xf32>
      %13 = vector.shape_cast %12 : vector<1x1x16xf32> to vector<1x16xf32>
      %14 = tpu.iota {dimensions = array<i32: 0>} : vector<16x16xi32>
      %15 = tpu.iota {dimensions = array<i32: 1>} : vector<16x16xi32>
      %16 = arith.subi %14, %15 : vector<16x16xi32>
      %17 = arith.index_cast %arg0 : i32 to index
      %18 = memref.load %arg3[%17] : memref<2xi32, #tpu.memory_space<smem>>
      %19 = vector.broadcast %18 : i32 to vector<16x16xi32>
      %20 = arith.subi %16, %19 : vector<16x16xi32>
      %c0_i32_13 = arith.constant 0 : i32
      %21 = vector.broadcast %c0_i32_13 : i32 to vector<16x16xi32>
      %22 = arith.cmpi eq, %20, %21 : vector<16x16xi32>
      %c1_i32 = arith.constant 1 : i32
      %23 = vector.broadcast %c1_i32 : i32 to vector<16x16xi32>
      %24 = arith.cmpi eq, %20, %23 : vector<16x16xi32>
      %cst_14 = arith.constant 0.000000e+00 : f32
      %25 = vector.shape_cast %13 : vector<1x16xf32> to vector<1x16xf32>
      %26 = vector.broadcast %25 : vector<1x16xf32> to vector<16x16xf32>
      %27 = vector.broadcast %cst_14 : f32 to vector<16x16xf32>
      %28 = arith.select %24, %26, %27 : vector<16x16xi1>, vector<16x16xf32>
      %29 = vector.shape_cast %11 : vector<1x16xf32> to vector<1x16xf32>
      %30 = vector.broadcast %29 : vector<1x16xf32> to vector<16x16xf32>
      %31 = arith.select %22, %30, %28 : vector<16x16xi1>, vector<16x16xf32>
      %c0_15 = arith.constant 0 : index
      %c0_16 = arith.constant 0 : index
      %32 = vector.load %arg6[%c0_15, %c0_16] : memref<16x16xf32, #tpu.memory_space<vmem>>, vector<16x16xf32>
      tpu.vector_store %arg6[%c0_15, %c0_16], %31 {strides = array<i32>} : memref<16x16xf32, #tpu.memory_space<vmem>>, vector<16x16xf32>,
    } else {
    }
    %c0 = arith.constant 0 : index
    %c0_1 = arith.constant 0 : index
    %c0_2 = arith.constant 0 : index
    %3 = vector.load %arg4[%c0, %c0_1, %c0_2] : memref<1x4x16xf32, #tpu.memory_space<vmem>>, vector<1x4x16xf32>
    %4 = vector.shape_cast %3 : vector<1x4x16xf32> to vector<4x16xf32>
    %c0_3 = arith.constant 0 : index
    %c0_4 = arith.constant 0 : index
    %5 = vector.load %arg6[%c0_3, %c0_4] : memref<16x16xf32, #tpu.memory_space<vmem>>, vector<16x16xf32>
    %cst = arith.constant dense<0.000000e+00> : vector<4x16xf32>
    %6 = tpu.matmul %4, %5, %cst {dimension_numbers = #tpu.dot_dimension_numbers<[1], [0], [0], [1], [0, 0, 1, 1], [], []>} : vector<4x16xf32>, vector<16x16xf32>, vector<4x16xf32> -> vector<4x16xf32>
    %c0_5 = arith.constant 0 : index
    %c0_6 = arith.constant 0 : index
    %c0_7 = arith.constant 0 : index
    %7 = vector.load %arg5[%c0_5, %c0_6, %c0_7] : memref<1x4x16xf32, #tpu.memory_space<vmem>>, vector<1x4x16xf32>
    %8 = vector.shape_cast %7 : vector<1x4x16xf32> to vector<4x16xf32>
    %9 = vector.shape_cast %6 : vector<4x16xf32> to vector<1x4x16xf32>
    tpu.vector_store %arg5[%c0_5, %c0_6, %c0_7], %9 {strides = array<i32>} : memref<1x4x16xf32, #tpu.memory_space<vmem>>, vector<1x4x16xf32>,
    return
  }
  func.func @transform_0(%arg0: i32, %arg1: i32) -> (i32, i32, i32) {
    %c0_i32 = arith.constant 0 : i32
    %c0_i32_0 = arith.constant 0 : i32
    %c0_i32_1 = arith.constant 0 : i32
    return %arg0, %c0_i32, %c0_i32_0 : i32, i32, i32
  }
  func.func @transform_1(%arg0: i32, %arg1: i32) -> i32 {
    %c0_i32 = arith.constant 0 : i32
    %c0_i32_0 = arith.constant 0 : i32
    return %c0_i32 : i32
  }
  func.func @transform_2(%arg0: i32, %arg1: i32) -> (i32, i32, i32) {
    %c0_i32 = arith.constant 0 : i32
    %c0_i32_0 = arith.constant 0 : i32
    return %arg0, %arg1, %c0_i32 : i32, i32, i32
  }
  func.func @transform_3(%arg0: i32, %arg1: i32) -> (i32, i32, i32) {
    %c0_i32 = arith.constant 0 : i32
    %c0_i32_0 = arith.constant 0 : i32
    return %arg0, %arg1, %c0_i32 : i32, i32, i32
  }
}

</mosaic_0001>

<llo_original>
// kernel: tpu_custom_call.1
$region0: #{tpu_custom_call.1}
  #allocation0 [shape = 'u32[]', space=smem, size = 0x4, offset = 0x4, fixed_abs, tag = 'smem constant byte address 0x4 - core index']
  #allocation1 [shape = 'u32[144,128]{1,0:T(1,128)}', space=vmem, size = 0x12000, scoped, tag = 'internal scratch']
  #allocation2 [shape = 'f32[16,16]{1,0:T(8,128)}', space=vmem, size = 0x2000, scoped, tag = 'scratch operand']
  %s0 = inlined_call_operand.hbm [shape: f32[2,2,16], index: 0, kind: input, shape index: {}]
  %s1 = inlined_call_operand.vmem [shape: s32[2], index: 1, kind: input, shape index: {}]
  %s2 = inlined_call_operand.hbm [shape: f32[2,4,16], index: 2, kind: input, shape index: {}]
  %s3 = inlined_call_operand.hbm [shape: f32[2,4,16], index: 3, kind: output, shape index: {}]
  %s4 = sld [smem:[#allocation0]]
  $region61: #{tpu_custom_call.1} parent=0
    _
  %s6 = ssub.s32 1, %s4
  %s7 = scalar_select 0, %s6, %s4
  $region1: #{tpu_custom_call.1} parent=0
    #allocation3 [shape = 'u8[2048]{0}', space=vmem, size = 0x800, scoped, tag = 'input window, operand 0']
    #allocation4 [shape = 's32[2]{0}', space=sflag, size = 0x8, scoped, tag = 'scoped memory for tpu_custom_call.1']
    #allocation5 [shape = 's32[2]{0}', space=sflag, size = 0x8, scoped, tag = 'scoped memory for tpu_custom_call.1']
    #allocation6 [shape = 's32[2]{0}', space=sflag, size = 0x8, scoped, tag = 'scoped memory for tpu_custom_call.1']
    #allocation7 [shape = 'u8[512]{0}', space=smem, size = 0x200, scoped, tag = 'input window, operand 1, single buffered']
    #allocation8 [shape = 'u8[4096]{0}', space=vmem, size = 0x1000, scoped, tag = 'input window, operand 2']
    #allocation9 [shape = 's32[2]{0}', space=sflag, size = 0x8, scoped, tag = 'scoped memory for tpu_custom_call.1']
    #allocation10 [shape = 'u8[4096]{0}', space=vmem, size = 0x1000, scoped, tag = 'output window, operand 0']
    %8 = vsyncpa [#allocation4], 0
    %s9 = scalar_lea.sflag [#allocation4], 1
    %10 = vsyncpa %s9, 0
    %11 = vsyncpa [#allocation6], 0
    %12 = vsyncpa [#allocation9], 0
    %s13 = scalar_lea.sflag [#allocation9], 1
    %14 = vsyncpa %s13, 0
    %15 = vsyncpa [#allocation5], 0
    %s16 = scalar_lea.sflag [#allocation5], 1
    %17 = vsyncpa %s16, 0
    loop: start=0, step=1, limit=4
    $region2: #{tpu_custom_call.1} parent=1 // loop_pre_header
      _
    $region3: #{tpu_custom_call.1} parent=1 // loop_header
      %s19 = sphi 0, %s23
      %p20 = scmp.ge.s32.totalorder %s19, 4
      %s26 = sphi 0, %s38
      %s27 = sphi 0, %s34
      %s28 = sphi 0, %s26
      %s29 = sphi 0, %s27
      %s30 = sphi 0, %s28
      %s31 = sphi 0, %s29
      %s41 = sphi 0, %s43
      %s44 = sphi 0, %s41
      %s45 = sphi 0, %s44
      %s61 = sphi 0, %s45
      %s65 = sphi 0, %s65
      %s67 = sphi 0, %s65
      %s68 = sphi 0, %s67
      %s82 = sphi 0, %s68
      %s90 = sphi 0, %s92
      %s93 = sphi 0, %s90
      %s94 = sphi 0, %s93
      %s110 = sphi 0, %s94
      %s118 = sphi 0, %s120
      %s121 = sphi 0, %s118
      %s122 = sphi 0, %s121
      %s138 = sphi 0, %s122
    $region4: #{tpu_custom_call.1} parent=1 // loop_header_branch
      %22 = sbr.rel (%p20) target = $region8
    $region5: #{tpu_custom_call.1} parent=1 // loop_body
      %s24 = ssub.s32 %s19, 1
      %s25 = ssub.s32 %s19, 2
      %s32 = sadd.s32 1, %s27
      %p33 = scmp.ge.s32.totalorder %s32, 1
      %s34 = scalar_select %p33, 0, %s32
      %s35 = sadd.s32 1, %s26
      %s36 = scalar_select %p33, %s35, %s26
      %p37 = scmp.ge.s32.totalorder %s36, 2
      %s38 = scalar_select %p37, 0, %s36
      %s39 = ssub.s32 %s26, %s38
      %p40 = scmp.eq.s32.totalorder %s39, 0
      %s42 = sadd.s32 %s41, 1
      %s43 = scalar_select %p40, %s41, %s42
      %p46 = pneg %p40
      %p47 = scmp.eq.s32.totalorder %s19, 1
      %p48 = por %p46, %p47
      %p49 = scmp.ne.s32.totalorder %s41, %s44
      %p50 = scmp.eq.s32.totalorder %s19, 0
      %p51 = por %p49, %p50
      %p52 = scmp.ne.s32.totalorder %s41, %s44
      %p53 = scmp.eq.s32.totalorder %s24, 1
      %p54 = por %p52, %p53
      %p55 = scmp.ne.s32.totalorder %s44, %s45
      %p56 = scmp.eq.s32.totalorder %s24, 0
      %p57 = por %p55, %p56
      %p58 = scmp.ne.s32.totalorder %s44, %s45
      %p59 = scmp.eq.s32.totalorder %s25, 1
      %p60 = por %p58, %p59
      %p62 = scmp.ne.s32.totalorder %s45, %s61
      %p63 = scmp.eq.s32.totalorder %s25, 0
      %p64 = por %p62, %p63
      %s66 = sadd.s32 %s65, 1
      %p69 = scmp.eq.s32.totalorder %s19, 1
      %p70 = scmp.ne.s32.totalorder %s65, %s67
      %p71 = scmp.eq.s32.totalorder %s19, 0
      %p72 = por %p70, %p71
      %p73 = scmp.ne.s32.totalorder %s65, %s67
      %p74 = scmp.eq.s32.totalorder %s24, 1
      %p75 = por %p73, %p74
      %p76 = scmp.ne.s32.totalorder %s67, %s68
      %p77 = scmp.eq.s32.totalorder %s24, 0
      %p78 = por %p76, %p77
      %p79 = scmp.ne.s32.totalorder %s67, %s68
      %p80 = scmp.eq.s32.totalorder %s25, 1
      %p81 = por %p79, %p80
      %p83 = scmp.ne.s32.totalorder %s68, %s82
      %p84 = scmp.eq.s32.totalorder %s25, 0
      %p85 = por %p83, %p84
      %s86 = ssub.s32 %s26, %s38
      %s87 = ssub.s32 %s27, %s34
      %s88 = sor.u32 %s86, %s87
      %p89 = scmp.eq.s32.totalorder %s88, 0
      %s91 = sadd.s32 %s90, 1
      %s92 = scalar_select %p89, %s90, %s91
      %p95 = pneg %p89
      %p96 = scmp.eq.s32.totalorder %s19, 1
      %p97 = por %p95, %p96
      %p98 = scmp.ne.s32.totalorder %s90, %s93
      %p99 = scmp.eq.s32.totalorder %s19, 0
      %p100 = por %p98, %p99
      %p101 = scmp.ne.s32.totalorder %s90, %s93
      %p102 = scmp.eq.s32.totalorder %s24, 1
      %p103 = por %p101, %p102
      %p104 = scmp.ne.s32.totalorder %s93, %s94
      %p105 = scmp.eq.s32.totalorder %s24, 0
      %p106 = por %p104, %p105
      %p107 = scmp.ne.s32.totalorder %s93, %s94
      %p108 = scmp.eq.s32.totalorder %s25, 1
      %p109 = por %p107, %p108
      %p111 = scmp.ne.s32.totalorder %s94, %s110
      %p112 = scmp.eq.s32.totalorder %s25, 0
      %p113 = por %p111, %p112
      %s114 = ssub.s32 %s26, %s38
      %s115 = ssub.s32 %s27, %s34
      %s116 = sor.u32 %s114, %s115
      %p117 = scmp.eq.s32.totalorder %s116, 0
      %s119 = sadd.s32 %s118, 1
      %s120 = scalar_select %p117, %s118, %s119
      %p123 = pneg %p117
      %p124 = scmp.eq.s32.totalorder %s19, 1
      %p125 = por %p123, %p124
      %p126 = scmp.ne.s32.totalorder %s118, %s121
      %p127 = scmp.eq.s32.totalorder %s19, 0
      %p128 = por %p126, %p127
      %p129 = scmp.ne.s32.totalorder %s118, %s121
      %p130 = scmp.eq.s32.totalorder %s24, 1
      %p131 = por %p129, %p130
      %p132 = scmp.ne.s32.totalorder %s121, %s122
      %p133 = scmp.eq.s32.totalorder %s24, 0
      %p134 = por %p132, %p133
      %p135 = scmp.ne.s32.totalorder %s121, %s122
      %p136 = scmp.eq.s32.totalorder %s25, 1
      %p137 = por %p135, %p136
      %p139 = scmp.ne.s32.totalorder %s122, %s138
      %p140 = scmp.eq.s32.totalorder %s25, 0
      %p141 = por %p139, %p140
      %p142 = scmp.le.s32.totalorder 1, %s19
      %p143 = scmp.lt.s32.totalorder %s19, 3
      %p144 = pnand %p142, %p143
      %p145 = pneg %p144
      // Predicated region
      $region9: #{tpu_custom_call.1} parent=5 // pred_check
        _
      $region10: #{tpu_custom_call.1} parent=5 // pred_check_branch
        %147 = sbr.rel (%p144) target = $region12
      $region11: #{tpu_custom_call.1} parent=5 // pred_region
        %s148 = ssub.s32 %s19, 1
        // Predicated region
        $region13: #{tpu_custom_call.1} parent=11 // pred_check
          %p149 = pneg %p78
        $region14: #{tpu_custom_call.1} parent=11 // pred_check_branch
          %151 = sbr.rel (%p149) target = $region16
        $region15: #{tpu_custom_call.1} parent=11 // pred_region
          %s153 = ssub.s32 16, 16
          %154 = vsyncadd [#allocation6], %s153
          %s156 = sshll.u32 %s1, 4
          %s157 = int_to_ptr.vmem [resolvable:$true] %s156
          %159 = dma.vmem_to_smem %s157, 16, [#allocation7], [#allocation6]
        $region16: #{tpu_custom_call.1} parent=11 // pred_fallthru
          _
      $region12: #{tpu_custom_call.1} parent=5 // pred_fallthru
        _
      %p160 = scmp.lt.s32.totalorder %s19, 2
      // Predicated region
      $region17: #{tpu_custom_call.1} parent=5 // pred_check
        %p161 = pneg %p160
      $region18: #{tpu_custom_call.1} parent=5 // pred_check_branch
        %163 = sbr.rel (%p161) target = $region20
      $region19: #{tpu_custom_call.1} parent=5 // pred_region
        // Predicated region
        $region21: #{tpu_custom_call.1} parent=19 // pred_check
          %p164 = pneg %p51
        $region22: #{tpu_custom_call.1} parent=19 // pred_check_branch
          %166 = sbr.rel (%p164) target = $region24
        $region23: #{tpu_custom_call.1} parent=19 // pred_region
          %s167 = sand.u32 %s41, 1
          %s168 = scalar_lea.sflag [#allocation4], %s167
          %s169 = sand.u32 %s41, 1
          %s170 = smul.addr %s169, 2
          %s171 = scalar_lea.vmem [#allocation3], %s170
          %s173 = ssub.s32 32, 32
          %174 = vsyncadd %s168, %s173
          %s175 = smul.addr %s26, 32
          %s176 = scalar_lea.hbm %s0, %s175
          %s178 = sshll.u32 %s171, 4
          %s179 = int_to_ptr.vmem [resolvable:$true] %s178
          %181 = dma.hbm_to_vmem [thread:$0]  %s176, 32, %s179, %s168
        $region24: #{tpu_custom_call.1} parent=19 // pred_fallthru
          _
        // Predicated region
        $region25: #{tpu_custom_call.1} parent=19 // pred_check
          %p182 = pneg %p100
        $region26: #{tpu_custom_call.1} parent=19 // pred_check_branch
          %184 = sbr.rel (%p182) target = $region28
        $region27: #{tpu_custom_call.1} parent=19 // pred_region
          %s185 = sand.u32 %s90, 1
          %s186 = scalar_lea.sflag [#allocation9], %s185
          %s187 = sand.u32 %s90, 1
          %s188 = smul.addr %s187, 4
          %s189 = scalar_lea.vmem [#allocation8], %s188
          %s191 = ssub.s32 64, 64
          %192 = vsyncadd %s186, %s191
          %s193 = sadd.s32 %s27, %s26
          %s194 = smul.addr %s193, 64
          %s195 = scalar_lea.hbm %s2, %s194
          %s197 = sshll.u32 %s189, 4
          %s198 = int_to_ptr.vmem [resolvable:$true] %s197
          %200 = dma.hbm_to_vmem [thread:$0]  %s195, 64, %s198, %s186
        $region28: #{tpu_custom_call.1} parent=19 // pred_fallthru
          _
      $region20: #{tpu_custom_call.1} parent=5 // pred_fallthru
        _
      %p201 = scmp.le.s32.totalorder 1, %s19
      %p202 = scmp.lt.s32.totalorder %s19, 3
      %p203 = pnand %p201, %p202
      %p204 = pneg %p203
      // Predicated region
      $region29: #{tpu_custom_call.1} parent=5 // pred_check
        _
      $region30: #{tpu_custom_call.1} parent=5 // pred_check_branch
        %206 = sbr.rel (%p203) target = $region32
      $region31: #{tpu_custom_call.1} parent=5 // pred_region
        %s207 = ssub.s32 %s19, 1
        %s208 = sand.u32 %s44, 1
        %s209 = scalar_lea.sflag [#allocation4], %s208
        %s210 = sand.u32 %s44, 1
        %s211 = smul.addr %s210, 2
        %s212 = scalar_lea.vmem [#allocation3], %s211
        // Predicated region
        $region33: #{tpu_custom_call.1} parent=31 // pred_check
          %p213 = pneg %p57
        $region34: #{tpu_custom_call.1} parent=31 // pred_check_branch
          %215 = sbr.rel (%p213) target = $region36
        $region35: #{tpu_custom_call.1} parent=31 // pred_region
          %216 = dma.done %s209, 32
        $region36: #{tpu_custom_call.1} parent=31 // pred_fallthru
          _
        // Predicated region
        $region37: #{tpu_custom_call.1} parent=31 // pred_check
          %p217 = pneg %p78
        $region38: #{tpu_custom_call.1} parent=31 // pred_check_branch
          %219 = sbr.rel (%p217) target = $region40
        $region39: #{tpu_custom_call.1} parent=31 // pred_region
          %220 = dma.done [#allocation6], 16
        $region40: #{tpu_custom_call.1} parent=31 // pred_fallthru
          _
        %s221 = sand.u32 %s93, 1
        %s222 = scalar_lea.sflag [#allocation9], %s221
        %s223 = sand.u32 %s93, 1
        %s224 = smul.addr %s223, 4
        %s225 = scalar_lea.vmem [#allocation8], %s224
        // Predicated region
        $region41: #{tpu_custom_call.1} parent=31 // pred_check
          %p226 = pneg %p106
        $region42: #{tpu_custom_call.1} parent=31 // pred_check_branch
          %228 = sbr.rel (%p226) target = $region44
        $region43: #{tpu_custom_call.1} parent=31 // pred_region
          %229 = dma.done %s222, 64
        $region44: #{tpu_custom_call.1} parent=31 // pred_fallthru
          _
        %230 = sfence
        %s231 = sand.u32 %s44, 1
        %s232 = scalar_lea.sflag [#allocation4], %s231
        %s233 = sand.u32 %s44, 1
        %s234 = smul.addr %s233, 2
        %s235 = scalar_lea.vmem [#allocation3], %s234
        %p236 = pneg %p57
        %p237 = pneg %p54
        %p238 = pneg %p78
        %p239 = pneg %p75
        %s240 = sand.u32 %s93, 1
        %s241 = scalar_lea.sflag [#allocation9], %s240
        %s242 = sand.u32 %s93, 1
        %s243 = smul.addr %s242, 4
        %s244 = scalar_lea.vmem [#allocation8], %s243
        %p245 = pneg %p106
        %p246 = pneg %p103
        %p247 = pneg %p134
        %p248 = pneg %p131
        %s249 = sand.u32 %s121, 1
        %s250 = scalar_lea.sflag [#allocation5], %s249
        %s251 = sand.u32 %s121, 1
        %s252 = smul.addr %s251, 4
        %s253 = scalar_lea.vmem [#allocation10], %s252
        %p254 = scmp.eq.s32.totalorder %s29, 0
        // Predicated region
        $region45: #{tpu_custom_call.1} parent=31 // pred_check
          %p255 = pneg %p254
        $region46: #{tpu_custom_call.1} parent=31 // pred_check_branch
          %257 = sbr.rel (%p255) target = $region48
        $region47: #{tpu_custom_call.1} parent=31 // pred_region
          %v258 = vld [vmem:[%s212] sm:$0x1]
          %v259 = vld [vmem:[%s212 + $0x1] sm:$0x1]
          %v260 = vlaneseq
          %v261 = vshrl.u32 %v260, 7
          %v262 = vadd.s32 %v261, 8
          %v263 = vlaneseq
          %v264 = vand.u32 %v263, 127
          %v265 = vsub.s32 %v261, %v264
          %v266 = vsub.s32 %v262, %v264
          %s267 = sld [smem:[#allocation7 + %s28]]
          %v268 = vstv %s267
          %v269 = vsub.s32 %v265, %v268
          %v270 = vsub.s32 %v266, %v268
          %vm271 = vcmp.eq.s32.totalorder %v269, 0
          %vm272 = vcmp.eq.s32.totalorder %v270, 0
          %vm273 = vcmp.eq.s32.totalorder %v269, 1
          %vm274 = vcmp.eq.s32.totalorder %v270, 1
          %v275 = vlaneseq
          %v276 = vshrl.u32 %v275, 7
          %v277 = vsub.s32 0, %v276
          %v278 = vrot.slane %v259, %v277
          %v279 = vsel %vm273, %v278, 0.0
          %v280 = vsel %vm274, %v278, 0.0
          %v281 = vlaneseq
          %v282 = vshrl.u32 %v281, 7
          %v283 = vsub.s32 0, %v282
          %v284 = vrot.slane %v258, %v283
          %v285 = vsel %vm271, %v284, %v279
          %v286 = vsel %vm272, %v284, %v280
          %vm287 = vcmask 130048
          %288 = vst.msk [vmem:[#allocation2] sm:$0xff] %vm287, %v285
          %289 = vst.msk [vmem:[#allocation2 + $0x8] sm:$0xff] %vm287, %v286
        $region48: #{tpu_custom_call.1} parent=31 // pred_fallthru
          _
        %v290 = vld [vmem:[%s225] sm:$0xf]
        %v291 = vld [vmem:[#allocation2] sm:$0xff]
        %v292 = vld [vmem:[#allocation2 + $0x8] sm:$0xff]
        %vm293 = vcmask 130048
        %v295 = vsel %vm293, %v290, 0
        %297 = vmatprep.subr.mxu0 0.0
        %298 = vmatpush1.msra.mxu0 %v291
        %299 = vmatprep.subr.mxu0 0.0
        %300 = vmatpush1.msra.mxu0 %v292
        %301 = vmatprep.subr.mxu0 0.0
        %302 = vmatpush1.msra.mxu0 0.0
        %303 = vmatprep.subr.mxu0 0.0
        %304 = vmatpush1.msra.mxu0 0.0
        %305 = vmatprep.subr.mxu0 0.0
        %306 = vmatpush1.msra.mxu0 0.0
        %307 = vmatprep.subr.mxu0 0.0
        %308 = vmatpush1.msra.mxu0 0.0
        %309 = vmatprep.subr.mxu0 0.0
        %310 = vmatpush1.msra.mxu0 0.0
        %311 = vmatprep.subr.mxu0 0.0
        %312 = vmatpush1.msra.mxu0 0.0
        %313 = vmatprep.subr.mxu0 0.0
        %314 = vmatpush1.msra.mxu0 0.0
        %315 = vmatprep.subr.mxu0 0.0
        %316 = vmatpush1.msra.mxu0 0.0
        %317 = vmatprep.subr.mxu0 0.0
        %318 = vmatpush1.msra.mxu0 0.0
        %319 = vmatprep.subr.mxu0 0.0
        %320 = vmatpush1.msra.mxu0 0.0
        %321 = vmatprep.subr.mxu0 0.0
        %322 = vmatpush1.msra.mxu0 0.0
        %323 = vmatprep.subr.mxu0 0.0
        %324 = vmatpush1.msra.mxu0 0.0
        %325 = vmatprep.subr.mxu0 0.0
        %326 = vmatpush1.msra.mxu0 0.0
        %327 = vmatprep.subr.mxu0 0.0
        %328 = vmatpush1.msra.mxu0 0.0
        %329 = vmatprep.subr.mxu0 0.0
        %330 = vmatpush1.msra.mxu0 0.0
        %331 = vmatprep.subr.mxu0 0.0
        %332 = vmatpush1.msra.mxu0 0.0
        %333 = vmatprep.subr.mxu0 0.0
        %334 = vmatpush1.msra.mxu0 0.0
        %335 = vmatprep.subr.mxu0 0.0
        %336 = vmatpush1.msra.mxu0 0.0
        %337 = vmatprep.subr.mxu0 0.0
        %338 = vmatpush1.msra.mxu0 0.0
        %339 = vmatprep.subr.mxu0 0.0
        %340 = vmatpush1.msra.mxu0 0.0
        %341 = vmatprep.subr.mxu0 0.0
        %342 = vmatpush1.msra.mxu0 0.0
        %343 = vmatprep.subr.mxu0 0.0
        %344 = vmatpush1.msra.mxu0 0.0
        %345 = vmatprep.subr.mxu0 0.0
        %346 = vmatpush1.msra.mxu0 0.0
        %347 = vmatprep.subr.mxu0 0.0
        %348 = vmatpush1.msra.mxu0 0.0
        %349 = vmatprep.subr.mxu0 0.0
        %350 = vmatpush1.msra.mxu0 0.0
        %351 = vmatprep.subr.mxu0 0.0
        %352 = vmatpush1.msra.mxu0 0.0
        %353 = vmatprep.subr.mxu0 0.0
        %354 = vmatpush1.msra.mxu0 0.0
        %355 = vmatprep.subr.mxu0 0.0
        %356 = vmatpush1.msra.mxu0 0.0
        %357 = vmatprep.subr.mxu0 0.0
        %358 = vmatpush1.msra.mxu0 0.0
        %359 = vmatprep.subr.mxu0 0.0
        %360 = vmatpush1.msra.mxu0 0.0
        %361 = vmatprep.mubr.f32.mxu0 0.0
        %362 = vmatmul.mubr.f32.gmra.mrb[0].mxu0 %v295
        %v363 = vpop.f32.mrb[0].mxu0
        %v364 = vadd.f32 0.0, %v363
        %v365 = vpop.f32.mrb[0].mxu0
        %366 = vdwg.mxu0
        %vm367 = vcmask 125952
        %368 = vst.msk [vmem:[%s253] sm:$0xf] %vm367, %v364
        %s369 = sand.u32 %s121, 1
        %s370 = scalar_lea.sflag [#allocation5], %s369
        %s371 = sand.u32 %s121, 1
        %s372 = smul.addr %s371, 4
        %s373 = scalar_lea.vmem [#allocation10], %s372
        // Predicated region
        $region49: #{tpu_custom_call.1} parent=31 // pred_check
          %p374 = pneg %p131
        $region50: #{tpu_custom_call.1} parent=31 // pred_check_branch
          %376 = sbr.rel (%p374) target = $region52
        $region51: #{tpu_custom_call.1} parent=31 // pred_region
          %s378 = ssub.s32 64, 64
          %379 = vsyncadd %s370, %s378
          %s380 = sadd.s32 %s29, %s28
          %s381 = smul.addr %s380, 64
          %s382 = scalar_lea.hbm %s3, %s381
          %s384 = sshll.u32 %s373, 4
          %s385 = int_to_ptr.vmem [resolvable:$true] %s384
          %387 = dma.vmem_to_hbm [thread:$0]  %s385, 64, %s382, %s370
        $region52: #{tpu_custom_call.1} parent=31 // pred_fallthru
          _
      $region32: #{tpu_custom_call.1} parent=5 // pred_fallthru
        _
      %p388 = scmp.le.s32.totalorder 2, %s19
      // Predicated region
      $region53: #{tpu_custom_call.1} parent=5 // pred_check
        %p389 = pneg %p388
      $region54: #{tpu_custom_call.1} parent=5 // pred_check_branch
        %391 = sbr.rel (%p389) target = $region56
      $region55: #{tpu_custom_call.1} parent=5 // pred_region
        %s392 = ssub.s32 %s19, 2
        // Predicated region
        $region57: #{tpu_custom_call.1} parent=55 // pred_check
          %p393 = pneg %p137
        $region58: #{tpu_custom_call.1} parent=55 // pred_check_branch
          %395 = sbr.rel (%p393) target = $region60
        $region59: #{tpu_custom_call.1} parent=55 // pred_region
          %s396 = sand.u32 %s122, 1
          %s397 = scalar_lea.sflag [#allocation5], %s396
          %s398 = sand.u32 %s122, 1
          %s399 = smul.addr %s398, 4
          %s400 = scalar_lea.vmem [#allocation10], %s399
          %401 = dma.done %s397, 64
        $region60: #{tpu_custom_call.1} parent=55 // pred_fallthru
          _
      $region56: #{tpu_custom_call.1} parent=5 // pred_fallthru
        _
    $region6: #{tpu_custom_call.1} parent=1 // loop_footer
      %s23 = sadd.s32 1, %s19
    $region7: #{tpu_custom_call.1} parent=1 // loop_footer_branch
      %18 = sbr.rel target = $region3
    $region8: #{tpu_custom_call.1} parent=1 // loop_exit
      _
    %402 = vsyncpa [#allocation4], 1
    %s403 = scalar_lea.sflag [#allocation4], 1
    %404 = vsyncpa %s403, 1
    %405 = vsyncpa [#allocation9], 1
    %s406 = scalar_lea.sflag [#allocation9], 1
    %407 = vsyncpa %s406, 1
    %408 = vsyncpa [#allocation5], 1
    %s409 = scalar_lea.sflag [#allocation5], 1
    %410 = vsyncpa %s409, 1
    %411 = vsyncpa [#allocation6], 1
    %s412 = scalar_lea.sflag [#allocation6], 1
    %413 = vsyncpa %s412, 1

</llo_original>
